<compile_context>
chip_gen: v5e
topology: v5e:2x2
jax: 0.10.0
libtpu: 0.0.40
codegen_flags: <defaults>
</compile_context>

<pallas_src>
import functools

import jax
import jax.numpy as jnp
from jax.experimental import pallas as pl
from jax.experimental.pallas import tpu as pltpu

ACTION_SPACE = 5
HEAD_PAD = 8     # fused head rows: policy -> rows 0..4, value -> row 5, rows 6..7 pad
IN_PAD = 16      # input_dim (12) padded to a sublane-friendly size
TB_MAX = 2048    # max batch-tile rows (VMEM-safe on all generations)


def bacteria_kernel(x_ref, w1_ref, b1_ref, w2_ref, b2_ref, wht_ref, bht_ref, out_ref):
    x = x_ref[...]                                                     # [TB, IN_PAD]

    # fc1 + relu (batch-major)
    h1 = jnp.dot(x, w1_ref[...], preferred_element_type=jnp.float32) + b1_ref[...]
    h1 = jnp.maximum(h1, 0.0)                                          # [TB, 64]

    # fc2 + relu
    h2 = jnp.dot(h1, w2_ref[...], preferred_element_type=jnp.float32) + b2_ref[...]
    h2 = jnp.maximum(h2, 0.0)                                          # [TB, 64]

    # Fused policy/value head, feature-major: heads[r, b] = sum_k whT[r,k] * h2[b,k]
    heads = jax.lax.dot_general(
        wht_ref[...], h2, (((1,), (1,)), ((), ())),
        preferred_element_type=jnp.float32) + bht_ref[...]             # [8, TB]

    row = jax.lax.broadcasted_iota(jnp.int32, (HEAD_PAD, 1), 0)        # [8, 1]
    is_policy = row < ACTION_SPACE
    is_value = row == ACTION_SPACE

    # Softmax over the 5 policy rows only (pad rows masked to -inf -> exp == 0).
    logits = jnp.where(is_policy, heads, -jnp.inf)
    m = jnp.max(logits, axis=0, keepdims=True)                         # [1, TB]
    ex = jnp.exp(logits - m)                                           # [8, TB]
    den = jnp.sum(ex, axis=0, keepdims=True)                           # [1, TB]
    policy = ex / den                                                  # exact normalization

    value = jnp.tanh(heads)                                            # row 5 is the value

    out_ref[...] = jnp.where(is_policy, policy, jnp.where(is_value, value, 0.0))


def init_params(key, input_dim=12, hidden_dim=64, output_dim=ACTION_SPACE):
    """nn.Linear-style init: U(-1/sqrt(fan_in), 1/sqrt(fan_in)).
    Weights stored as [in_features, out_features]; biases as [1, out_features]."""
    def linear(k, fan_in, fan_out):
        kw, kb = jax.random.split(k)
        bound = 1.0 / jnp.sqrt(jnp.float32(fan_in))
        w = jax.random.uniform(kw, (fan_in, fan_out), jnp.float32, -bound, bound)
        b = jax.random.uniform(kb, (1, fan_out), jnp.float32, -bound, bound)
        return w, b

    k1, k2, k3, k4 = jax.random.split(key, 4)
    w1, b1 = linear(k1, input_dim, hidden_dim)
    w2, b2 = linear(k2, hidden_dim, hidden_dim)
    wp, bp = linear(k3, hidden_dim, output_dim)
    wv, bv = linear(k4, hidden_dim, 1)
    return (w1, b1, w2, b2, wp, bp, wv, bv)


def pack_params(params, input_dim=12, hidden_dim=64):
    """Host-side packing: pad w1 to IN_PAD rows; fuse+transpose the heads to [8, hidden]."""
    w1, b1, w2, b2, wp, bp, wv, bv = params
    w1p = jnp.zeros((IN_PAD, hidden_dim), jnp.float32).at[:input_dim, :].set(w1)
    wht = jnp.zeros((HEAD_PAD, hidden_dim), jnp.float32)
    wht = wht.at[:ACTION_SPACE, :].set(wp.T).at[ACTION_SPACE, :].set(wv[:, 0])
    bht = jnp.zeros((HEAD_PAD, 1), jnp.float32)
    bht = bht.at[:ACTION_SPACE, 0].set(bp[0]).at[ACTION_SPACE, 0].set(bv[0, 0])
    return (w1p, b1, w2, b2, wht, bht)


def _round_up(n, m):
    return ((n + m - 1) // m) * m


def _choose_tile(batch, tb_max):
    bp8 = _round_up(max(batch, 1), 8)
    if bp8 <= 256:
        # Tiny batch: single grid step; block == full array (no 128-alignment needed).
        return bp8, bp8
    # Larger batch: lane-aligned (128-multiple) tiles, and aim for >= 2 grid
    # steps so v7x's two TensorCores both get work; cap the tile at tb_max.
    tb = min(tb_max, _round_up(pl.cdiv(bp8, 2), 128))
    bp = _round_up(bp8, tb)
    return tb, bp


@functools.partial(jax.jit, static_argnames=("tb_max",))
def bacteria_net_forward(x, packed_params, *, tb_max=TB_MAX):
    """x: [B, input_dim] float32. Returns (policy [B, ACTION_SPACE], value [B, 1])."""
    B, input_dim = x.shape
    w1p, b1, w2, b2, wht, bht = packed_params
    hidden = w1p.shape[1]

    TB, Bp = _choose_tile(B, tb_max)
    # One cheap pad: features 12 -> IN_PAD and batch -> Bp.  Pad rows are zero,
    # stay finite through the net, and their output columns are sliced away.
    xp = jnp.pad(x, ((0, Bp - B), (0, IN_PAD - input_dim)))

    resident = lambda i: (0, 0)  # weights/biases VMEM-resident across the grid
    flops = 2 * Bp * (IN_PAD * hidden + hidden * hidden + hidden * HEAD_PAD)
    bytes_accessed = (Bp * (IN_PAD + HEAD_PAD) * 4
                      + (IN_PAD * hidden + hidden + hidden * hidden + hidden
                         + HEAD_PAD * hidden + HEAD_PAD) * 4)

    out = pl.pallas_call(
        bacteria_kernel,
        out_shape=jax.ShapeDtypeStruct((HEAD_PAD, Bp), jnp.float32),
        grid=(Bp // TB,),
        in_specs=[
            pl.BlockSpec((TB, IN_PAD), lambda i: (i, 0)),
            pl.BlockSpec((IN_PAD, hidden), resident),
            pl.BlockSpec((1, hidden), resident),
            pl.BlockSpec((hidden, hidden), resident),
            pl.BlockSpec((1, hidden), resident),
            pl.BlockSpec((HEAD_PAD, hidden), resident),
            pl.BlockSpec((HEAD_PAD, 1), resident),
        ],
        out_specs=pl.BlockSpec((HEAD_PAD, TB), lambda i: (0, i)),
        compiler_params=pltpu.CompilerParams(
            dimension_semantics=("parallel",)),
        cost_estimate=pl.CostEstimate(
            flops=flops,
            transcendentals=2 * HEAD_PAD * Bp,
            bytes_accessed=bytes_accessed),
    )(xp, w1p, b1, w2, b2, wht, bht)

    # Lane-dense [8, Bp] slab -> (policy, value) in the original batch-major layout.
    policy = out[:ACTION_SPACE, :B].T
    value = out[ACTION_SPACE:ACTION_SPACE + 1, :B].T
    return policy, value


def _reference(x, params):
    w1, b1, w2, b2, wp, bp, wv, bv = params
    h1 = jnp.maximum(x @ w1 + b1, 0.0)
    h2 = jnp.maximum(h1 @ w2 + b2, 0.0)
    policy = jax.nn.softmax(h2 @ wp + bp, axis=-1)
    value = jnp.tanh(h2 @ wv + bv)
    return policy, value


def _check(x, packed, params):
    policy, value = bacteria_net_forward(x, packed)
    jax.block_until_ready((policy, value))
    ref_p, ref_v = _reference(x, params)
    B = x.shape[0]
    assert policy.shape == (B, ACTION_SPACE) and value.shape == (B, 1)
    assert jnp.allclose(policy, ref_p, atol=1.5e-3)
    assert jnp.allclose(value, ref_v, atol=1e-4)
    assert jnp.allclose(jnp.sum(policy, axis=-1), 1.0, atol=1.5e-3)


if __name__ == "__main__":
    key = jax.random.PRNGKey(0)
    k_params, k_x1, k_x2, k_x3 = jax.random.split(key, 4)

    INPUT_DIM, HIDDEN_DIM = 12, 64
    params = init_params(k_params, INPUT_DIM, HIDDEN_DIM, ACTION_SPACE)
    packed = pack_params(params, INPUT_DIM, HIDDEN_DIM)

    # Case 1: small aligned batch.
    _check(jax.random.normal(k_x1, (8, INPUT_DIM), jnp.float32), packed, params)
    # Case 2: unaligned batch exercising the padding path.
    _check(jax.random.normal(k_x2, (13, INPUT_DIM), jnp.float32), packed, params)
    # Case 3: larger unaligned batch exercising the multi-step (2-tile) grid.
    _check(jax.random.normal(k_x3, (300, INPUT_DIM), jnp.float32), packed, params)

    print("KERNEL_OK")
</pallas_src>

<mosaic_0001>
module attributes {stable_mosaic.version = 11 : i64} {
  func.func @bacteria_kernel(%arg0: i32, %arg1: memref<8x16xf32, #tpu.memory_space<vmem>>, %arg2: memref<16x64xf32, #tpu.memory_space<vmem>>, %arg3: memref<1x64xf32, #tpu.memory_space<vmem>>, %arg4: memref<64x64xf32, #tpu.memory_space<vmem>>, %arg5: memref<1x64xf32, #tpu.memory_space<vmem>>, %arg6: memref<8x64xf32, #tpu.memory_space<vmem>>, %arg7: memref<8x1xf32, #tpu.memory_space<vmem>>, %arg8: memref<8x8xf32, #tpu.memory_space<vmem>>) attributes {dimension_semantics = [#tpu.dimension_semantics<parallel>], iteration_bounds = array<i64: 1>, scalar_prefetch = 0 : i64, scratch_operands = 0 : i64, tpu.core_type = #tpu.core_type<tc>, window_params = [{transform_indices = @transform_0, window_bounds = array<i64: 8, 16>}, {pipeline_mode = #tpu.pipeline_mode<synchronous>, transform_indices = @transform_1, window_bounds = array<i64: 16, 64>}, {pipeline_mode = #tpu.pipeline_mode<synchronous>, transform_indices = @transform_2, window_bounds = array<i64: 1, 64>}, {pipeline_mode = #tpu.pipeline_mode<synchronous>, transform_indices = @transform_3, window_bounds = array<i64: 64, 64>}, {pipeline_mode = #tpu.pipeline_mode<synchronous>, transform_indices = @transform_4, window_bounds = array<i64: 1, 64>}, {pipeline_mode = #tpu.pipeline_mode<synchronous>, transform_indices = @transform_5, window_bounds = array<i64: 8, 64>}, {pipeline_mode = #tpu.pipeline_mode<synchronous>, transform_indices = @transform_6, window_bounds = array<i64: 8, 1>}, {transform_indices = @transform_7, window_bounds = array<i64: 8, 8>}]} {
    %c0 = arith.constant 0 : index
    %c0_0 = arith.constant 0 : index
    %0 = vector.load %arg1[%c0, %c0_0] : memref<8x16xf32, #tpu.memory_space<vmem>>, vector<8x16xf32>
    %c0_1 = arith.constant 0 : index
    %c0_2 = arith.constant 0 : index
    %1 = vector.load %arg2[%c0_1, %c0_2] : memref<16x64xf32, #tpu.memory_space<vmem>>, vector<16x64xf32>
    %cst = arith.constant dense<0.000000e+00> : vector<8x64xf32>
    %2 = tpu.matmul %0, %1, %cst {dimension_numbers = #tpu.dot_dimension_numbers<[1], [0], [0], [1], [0, 0, 1, 1], [], []>} : vector<8x16xf32>, vector<16x64xf32>, vector<8x64xf32> -> vector<8x64xf32>
    %c0_3 = arith.constant 0 : index
    %c0_4 = arith.constant 0 : index
    %3 = vector.load %arg3[%c0_3, %c0_4] : memref<1x64xf32, #tpu.memory_space<vmem>>, vector<1x64xf32>
    %4 = vector.broadcast %3 : vector<1x64xf32> to vector<8x64xf32>
    %5 = arith.addf %2, %4 : vector<8x64xf32>
    %cst_5 = arith.constant 0.000000e+00 : f32
    %6 = vector.broadcast %cst_5 : f32 to vector<8x64xf32>
    %7 = arith.maximumf %5, %6 : vector<8x64xf32>
    %c0_6 = arith.constant 0 : index
    %c0_7 = arith.constant 0 : index
    %8 = vector.load %arg4[%c0_6, %c0_7] : memref<64x64xf32, #tpu.memory_space<vmem>>, vector<64x64xf32>
    %cst_8 = arith.constant dense<0.000000e+00> : vector<8x64xf32>
    %9 = tpu.matmul %7, %8, %cst_8 {dimension_numbers = #tpu.dot_dimension_numbers<[1], [0], [0], [1], [0, 0, 1, 1], [], []>} : vector<8x64xf32>, vector<64x64xf32>, vector<8x64xf32> -> vector<8x64xf32>
    %c0_9 = arith.constant 0 : index
    %c0_10 = arith.constant 0 : index
    %10 = vector.load %arg5[%c0_9, %c0_10] : memref<1x64xf32, #tpu.memory_space<vmem>>, vector<1x64xf32>
    %11 = vector.broadcast %10 : vector<1x64xf32> to vector<8x64xf32>
    %12 = arith.addf %9, %11 : vector<8x64xf32>
    %cst_11 = arith.constant 0.000000e+00 : f32
    %13 = vector.broadcast %cst_11 : f32 to vector<8x64xf32>
    %14 = arith.maximumf %12, %13 : vector<8x64xf32>
    %c0_12 = arith.constant 0 : index
    %c0_13 = arith.constant 0 : index
    %15 = vector.load %arg6[%c0_12, %c0_13] : memref<8x64xf32, #tpu.memory_space<vmem>>, vector<8x64xf32>
    %cst_14 = arith.constant dense<0.000000e+00> : vector<8x8xf32>
    %16 = tpu.matmul %15, %14, %cst_14 {dimension_numbers = #tpu.dot_dimension_numbers<[1], [1], [0], [0], [0, 0, 1, 0], [], []>} : vector<8x64xf32>, vector<8x64xf32>, vector<8x8xf32> -> vector<8x8xf32>
    %c0_15 = arith.constant 0 : index
    %c0_16 = arith.constant 0 : index
    %17 = vector.load %arg7[%c0_15, %c0_16] : memref<8x1xf32, #tpu.memory_space<vmem>>, vector<8x1xf32>
    %18 = vector.broadcast %17 : vector<8x1xf32> to vector<8x8xf32>
    %19 = arith.addf %16, %18 : vector<8x8xf32>
    %20 = tpu.iota {dimensions = array<i32: 0>} : vector<8x1xi32>
    %c5_i32 = arith.constant 5 : i32
    %21 = vector.broadcast %c5_i32 : i32 to vector<8x1xi32>
    %22 = arith.cmpi slt, %20, %21 : vector<8x1xi32>
    %c5_i32_17 = arith.constant 5 : i32
    %23 = vector.broadcast %c5_i32_17 : i32 to vector<8x1xi32>
    %24 = arith.cmpi eq, %20, %23 : vector<8x1xi32>
    %cst_18 = arith.constant 0xFF800000 : f32
    %25 = vector.shape_cast %22 : vector<8x1xi1> to vector<8x1xi1>
    %26 = vector.broadcast %25 : vector<8x1xi1> to vector<8x8xi1>
    %27 = vector.broadcast %cst_18 : f32 to vector<8x8xf32>
    %28 = arith.select %26, %19, %27 : vector<8x8xi1>, vector<8x8xf32>
    %cst_19 = arith.constant dense<0xFF800000> : vector<8xf32>
    %29 = vector.multi_reduction <maximumf>, %28, %cst_19 [0] : vector<8x8xf32> to vector<8xf32>
    %30 = vector.shape_cast %29 : vector<8xf32> to vector<1x8xf32>
    %31 = vector.broadcast %30 : vector<1x8xf32> to vector<8x8xf32>
    %32 = arith.subf %28, %31 : vector<8x8xf32>
    %33 = math.exp %32 : vector<8x8xf32>
    %cst_20 = arith.constant dense<0.000000e+00> : vector<8xf32>
    %34 = vector.multi_reduction <add>, %33, %cst_20 [0] : vector<8x8xf32> to vector<8xf32>
    %35 = vector.shape_cast %34 : vector<8xf32> to vector<1x8xf32>
    %36 = vector.broadcast %35 : vector<1x8xf32> to vector<8x8xf32>
    %37 = arith.divf %33, %36 : vector<8x8xf32>
    %38 = math.tanh %19 : vector<8x8xf32>
    %cst_21 = arith.constant 0.000000e+00 : f32
    %39 = vector.shape_cast %24 : vector<8x1xi1> to vector<8x1xi1>
    %40 = vector.broadcast %39 : vector<8x1xi1> to vector<8x8xi1>
    %41 = vector.broadcast %cst_21 : f32 to vector<8x8xf32>
    %42 = arith.select %40, %38, %41 : vector<8x8xi1>, vector<8x8xf32>
    %43 = vector.shape_cast %22 : vector<8x1xi1> to vector<8x1xi1>
    %44 = vector.broadcast %43 : vector<8x1xi1> to vector<8x8xi1>
    %45 = arith.select %44, %37, %42 : vector<8x8xi1>, vector<8x8xf32>
    %c0_22 = arith.constant 0 : index
    %c0_23 = arith.constant 0 : index
    %46 = vector.load %arg8[%c0_22, %c0_23] : memref<8x8xf32, #tpu.memory_space<vmem>>, vector<8x8xf32>
    tpu.vector_store %arg8[%c0_22, %c0_23], %45 {strides = array<i32>} : memref<8x8xf32, #tpu.memory_space<vmem>>, vector<8x8xf32>,
    return
  }
  func.func @transform_0(%arg0: i32) -> (i32, i32) {
    %c0_i32 = arith.constant 0 : i32
    %c0_i32_0 = arith.constant 0 : i32
    return %arg0, %c0_i32 : i32, i32
  }
  func.func @transform_1(%arg0: i32) -> (i32, i32) {
    %c0_i32 = arith.constant 0 : i32
    %c0_i32_0 = arith.constant 0 : i32
    %c0_i32_1 = arith.constant 0 : i32
    return %c0_i32, %c0_i32_0 : i32, i32
  }
  func.func @transform_2(%arg0: i32) -> (i32, i32) {
    %c0_i32 = arith.constant 0 : i32
    %c0_i32_0 = arith.constant 0 : i32
    %c0_i32_1 = arith.constant 0 : i32
    return %c0_i32, %c0_i32_0 : i32, i32
  }
  func.func @transform_3(%arg0: i32) -> (i32, i32) {
    %c0_i32 = arith.constant 0 : i32
    %c0_i32_0 = arith.constant 0 : i32
    %c0_i32_1 = arith.constant 0 : i32
    return %c0_i32, %c0_i32_0 : i32, i32
  }
  func.func @transform_4(%arg0: i32) -> (i32, i32) {
    %c0_i32 = arith.constant 0 : i32
    %c0_i32_0 = arith.constant 0 : i32
    %c0_i32_1 = arith.constant 0 : i32
    return %c0_i32, %c0_i32_0 : i32, i32
  }
  func.func @transform_5(%arg0: i32) -> (i32, i32) {
    %c0_i32 = arith.constant 0 : i32
    %c0_i32_0 = arith.constant 0 : i32
    %c0_i32_1 = arith.constant 0 : i32
    return %c0_i32, %c0_i32_0 : i32, i32
  }
  func.func @transform_6(%arg0: i32) -> (i32, i32) {
    %c0_i32 = arith.constant 0 : i32
    %c0_i32_0 = arith.constant 0 : i32
    %c0_i32_1 = arith.constant 0 : i32
    return %c0_i32, %c0_i32_0 : i32, i32
  }
  func.func @transform_7(%arg0: i32) -> (i32, i32) {
    %c0_i32 = arith.constant 0 : i32
    %c0_i32_0 = arith.constant 0 : i32
    return %c0_i32, %arg0 : i32, i32
  }
}

</mosaic_0001>

<llo_original>
// kernel: bacteria_net_forward.1
$region0: #{bacteria_net_forward.1}
  #allocation0 [shape = 'u32[]', space=smem, size = 0x4, offset = 0x4, fixed_abs, tag = 'smem constant byte address 0x4 - core index']
  #allocation1 [shape = 'u32[72,128]{1,0:T(1,128)}', space=vmem, size = 0x9000, scoped, tag = 'internal scratch']
  %s0 = inlined_call_operand.vmem [shape: f32[8,16], index: 0, kind: input, shape index: {}]
  %s1 = inlined_call_operand.vmem [shape: f32[16,64], index: 1, kind: input, shape index: {}]
  %s2 = inlined_call_operand.vmem [shape: f32[1,64], index: 2, kind: input, shape index: {}]
  %s3 = inlined_call_operand.hbm [shape: f32[64,64], index: 3, kind: input, shape index: {}]
  %s4 = inlined_call_operand.vmem [shape: f32[1,64], index: 4, kind: input, shape index: {}]
  %s5 = inlined_call_operand.vmem [shape: f32[8,64], index: 5, kind: input, shape index: {}]
  %s6 = inlined_call_operand.vmem [shape: f32[8,1], index: 6, kind: input, shape index: {}]
  %s7 = inlined_call_operand.vmem [shape: f32[8,8], index: 7, kind: output, shape index: {}]
  %s8 = sld [smem:[#allocation0]]
  $region42: #{bacteria_net_forward.1} parent=0
    _
  %s10 = ssub.s32 1, %s8
  %s11 = scalar_select 0, %s10, %s8
  $region1: #{bacteria_net_forward.1} parent=0
    #allocation2 [shape = 'u8[32768]{0}', space=vmem, size = 0x8000, scoped, tag = 'input window, operand 3, single buffered']
    #allocation3 [shape = 's32[1]{0}', space=sflag, size = 0x4, scoped, tag = 'scoped memory for bacteria_net_forward.1']
    %12 = vsyncpa [#allocation3], 0
    // Predicated region
    $region2: #{bacteria_net_forward.1} parent=1 // pred_check
      _
    $region3: #{bacteria_net_forward.1} parent=1 // pred_check_branch
      %14 = sbr.rel (0) target = $region5
    $region4: #{bacteria_net_forward.1} parent=1 // pred_region
      _
    $region5: #{bacteria_net_forward.1} parent=1 // pred_fallthru
      _
    // Predicated region
    $region6: #{bacteria_net_forward.1} parent=1 // pred_check
      _
    $region7: #{bacteria_net_forward.1} parent=1 // pred_check_branch
      %16 = sbr.rel (0) target = $region9
    $region8: #{bacteria_net_forward.1} parent=1 // pred_region
      _
    $region9: #{bacteria_net_forward.1} parent=1 // pred_fallthru
      _
    // Predicated region
    $region10: #{bacteria_net_forward.1} parent=1 // pred_check
      _
    $region11: #{bacteria_net_forward.1} parent=1 // pred_check_branch
      %18 = sbr.rel (0) target = $region13
    $region12: #{bacteria_net_forward.1} parent=1 // pred_region
      _
    $region13: #{bacteria_net_forward.1} parent=1 // pred_fallthru
      _
    // Predicated region
    $region14: #{bacteria_net_forward.1} parent=1 // pred_check
      _
    $region15: #{bacteria_net_forward.1} parent=1 // pred_check_branch
      %20 = sbr.rel (0) target = $region17
    $region16: #{bacteria_net_forward.1} parent=1 // pred_region
      %22 = vsyncadd [#allocation3], 0
      %s23 = sshll.u32 %s3, 4
      %s24 = int_to_ptr.hbm [resolvable:$true] %s23
      %s25 = sshll.u32 [#allocation2], 4
      %s26 = int_to_ptr.vmem [resolvable:$true] %s25
      %31 = dma.hbm_to_vmem [thread:$0]  %s24, 1024, %s26, [#allocation3], 128, 128, 8
    $region17: #{bacteria_net_forward.1} parent=1 // pred_fallthru
      _
    // Predicated region
    $region18: #{bacteria_net_forward.1} parent=1 // pred_check
      _
    $region19: #{bacteria_net_forward.1} parent=1 // pred_check_branch
      %33 = sbr.rel (0) target = $region21
    $region20: #{bacteria_net_forward.1} parent=1 // pred_region
      _
    $region21: #{bacteria_net_forward.1} parent=1 // pred_fallthru
      _
    // Predicated region
    $region22: #{bacteria_net_forward.1} parent=1 // pred_check
      _
    $region23: #{bacteria_net_forward.1} parent=1 // pred_check_branch
      %35 = sbr.rel (0) target = $region25
    $region24: #{bacteria_net_forward.1} parent=1 // pred_region
      _
    $region25: #{bacteria_net_forward.1} parent=1 // pred_fallthru
      _
    // Predicated region
    $region26: #{bacteria_net_forward.1} parent=1 // pred_check
      _
    $region27: #{bacteria_net_forward.1} parent=1 // pred_check_branch
      %37 = sbr.rel (0) target = $region29
    $region28: #{bacteria_net_forward.1} parent=1 // pred_region
      _
    $region29: #{bacteria_net_forward.1} parent=1 // pred_fallthru
      _
    // Predicated region
    $region30: #{bacteria_net_forward.1} parent=1 // pred_check
      _
    $region31: #{bacteria_net_forward.1} parent=1 // pred_check_branch
      %39 = sbr.rel (0) target = $region33
    $region32: #{bacteria_net_forward.1} parent=1 // pred_region
      %41 = dma.done [#allocation3], 1024
    $region33: #{bacteria_net_forward.1} parent=1 // pred_fallthru
      _
    %v42 = vld [vmem:[%s0] sm:$0xff]
    %v43 = vld [vmem:[%s1] sm:$0xff]
    %v44 = vld [vmem:[%s1 + $0x8] sm:$0xff]
    %v45 = vld [vmem:[%s2] sm:$0x1]
    %v47 = vperm.slane %v45, 0
    %vm49 = vcmask 130048
    %v51 = vsel %vm49, %v42, 0
    %53 = vmatpush.msra.mxu0 0.0
    %54 = vmatpush.msra.mxu0 0.0
    %55 = vmatpush.msra.mxu0 0.0
    %56 = vmatpush.msra.mxu0 0.0
    %57 = vmatpush.msra.mxu0 0.0
    %58 = vmatpush.msra.mxu0 0.0
    %59 = vmatpush.msra.mxu0 0.0
    %60 = vmatpush.msra.mxu0 0.0
    %61 = vmatpush.msra.mxu0 0.0
    %62 = vmatpush.msra.mxu0 0.0
    %63 = vmatpush.msra.mxu0 0.0
    %64 = vmatpush.msra.mxu0 0.0
    %65 = vmatpush.msra.mxu0 0.0
    %66 = vmatpush.msra.mxu0 0.0
    %67 = vmatpush.msra.mxu0 %v44
    %68 = vmatpush.msra.mxu0 %v43
    %69 = vmatmul.f32.gmra.mxu0 %v51
    %v70 = vpop.f32.mrf.mxu0
    %v71 = vadd.f32 %v47, %v70
    %72 = vdwg.mxu0
    %v73 = vmax.f32 %v71, 0.0
    %v74 = vld [vmem:[#allocation2] sm:$0xff]
    %v75 = vld [vmem:[#allocation2 + $0x8] sm:$0xff]
    %v76 = vld [vmem:[#allocation2 + $0x10] sm:$0xff]
    %v77 = vld [vmem:[#allocation2 + $0x18] sm:$0xff]
    %v78 = vld [vmem:[#allocation2 + $0x20] sm:$0xff]
    %v79 = vld [vmem:[#allocation2 + $0x28] sm:$0xff]
    %v80 = vld [vmem:[#allocation2 + $0x30] sm:$0xff]
    %v81 = vld [vmem:[#allocation2 + $0x38] sm:$0xff]
    %v82 = vld [vmem:[%s4] sm:$0x1]
    %v84 = vperm.slane %v82, 0
    %vm86 = vcmask 523264
    %v88 = vsel %vm86, %v73, 0
    %90 = vmatpush.msra.mxu0 0.0
    %91 = vmatpush.msra.mxu0 0.0
    %92 = vmatpush.msra.mxu0 0.0
    %93 = vmatpush.msra.mxu0 0.0
    %94 = vmatpush.msra.mxu0 0.0
    %95 = vmatpush.msra.mxu0 0.0
    %96 = vmatpush.msra.mxu0 0.0
    %97 = vmatpush.msra.mxu0 0.0
    %98 = vmatpush.msra.mxu0 %v81
    %99 = vmatpush.msra.mxu0 %v80
    %100 = vmatpush.msra.mxu0 %v79
    %101 = vmatpush.msra.mxu0 %v78
    %102 = vmatpush.msra.mxu0 %v77
    %103 = vmatpush.msra.mxu0 %v76
    %104 = vmatpush.msra.mxu0 %v75
    %105 = vmatpush.msra.mxu0 %v74
    %106 = vmatmul.f32.gmra.mxu0 %v88
    %v107 = vpop.f32.mrf.mxu0
    %v108 = vadd.f32 %v84, %v107
    %109 = vdwg.mxu0
    %v110 = vmax.f32 %v108, 0.0
    %v111 = vld [vmem:[%s5] sm:$0xff]
    %v112 = vld [vmem:[%s6] sm:$0xff]
    %114 = vset.pattern.permute.xlu0 0
    %115 = vperm.xlu0 %114, %v112
    %v116 = vpop.permute.xlu0 %115
    %v119 = vsel %vm86, %v111, 0
    %v122 = vsel %vm86, %v110, 0
    %124 = vmatpush.xpose.msra.mxu0 0.0
    %125 = vmatpush.xpose.msra.mxu0 0.0
    %126 = vmatpush.xpose.msra.mxu0 0.0
    %127 = vmatpush.xpose.msra.mxu0 0.0
    %128 = vmatpush.xpose.msra.mxu0 0.0
    %129 = vmatpush.xpose.msra.mxu0 0.0
    %130 = vmatpush.xpose.msra.mxu0 0.0
    %131 = vmatpush.xpose.msra.mxu0 0.0
    %132 = vmatpush.xpose.msra.mxu0 0.0
    %133 = vmatpush.xpose.msra.mxu0 0.0
    %134 = vmatpush.xpose.msra.mxu0 0.0
    %135 = vmatpush.xpose.msra.mxu0 0.0
    %136 = vmatpush.xpose.msra.mxu0 0.0
    %137 = vmatpush.xpose.msra.mxu0 0.0
    %138 = vmatpush.xpose.msra.mxu0 0.0
    %139 = vmatpush.xpose.msra.mxu0 %v122
    %140 = vmatmul.f32.gmra.mxu0 %v119
    %v141 = vpop.f32.mrf.mxu0
    %v142 = vadd.f32 %v116, %v141
    %143 = vdwg.mxu0
    %v144 = vlaneseq
    %v145 = vshrl.u32 %v144, 7
    %vm146 = vcmp.lt.s32.totalorder %v145, 5
    %vm147 = vcmp.eq.s32.totalorder %v145, 5
    %v148 = vsel %vm146, 1, 0
    %vm149 = vcmp.eq.s32.totalorder %v148, 1
    %v150 = vsel %vm149, %v142, -inf
    %vm151 = vcmask 64512
    %v152 = vsel %vm151, %v150, -inf
    %v153 = vrot.slane %v152, 4
    %v154 = vmax.f32 %v152, %v153
    %v155 = vrot.slane %v154, 2
    %v156 = vmax.f32 %v154, %v155
    %v157 = vrot.slane %v156, 1
    %v158 = vmax.f32 %v156, %v157
    %v159 = vsub.f32 %v150, %v158
    %v160 = vmul.f32 %v159, 1.442695
    %v161 = vpow.pop %v160
    %v162 = vsel %vm151, %v161, 0.0
    %v163 = vrot.slane %v162, 4
    %v164 = vadd.f32 %v162, %v163
    %v165 = vrot.slane %v164, 2
    %v166 = vadd.f32 %v164, %v165
    %v167 = vrot.slane %v166, 1
    %v168 = vadd.f32 %v166, %v167
    %v169 = vrcp.pop %v168
    %v170 = vmul.f32 %v168, %v169
    %v171 = vsub.f32 1.0, %v170
    %v172 = vmul.f32 %v169, %v171
    %v173 = vadd.f32 %v169, %v172
    %vm174 = vweird.f32 %v168
    %vm175 = vweird.f32 %v169
    %vm176 = vmor %vm174, %vm175
    %v177 = vsel %vm176, %v169, %v173
    %v178 = vand.u32 2147483647, %v168
    %vm179 = vcmp.eq.f32.partialorder %v178, 8.507059e+37
    %v180 = vand.u32 %v168, 2147483648
    %v181 = vor.u32 1.1754944e-38, %v180
    %v182 = vsel %vm179, %v181, %v177
    %v183 = vmul.f32 %v161, %v182
    %v184 = vtanh.pop %v142
    %v185 = vsel %vm147, 1, 0
    %vm186 = vcmp.eq.s32.totalorder %v185, 1
    %v187 = vsel %vm186, %v184, 0.0
    %v188 = vsel %vm149, %v183, %v187
    %189 = vst.msk [vmem:[%s7] sm:$0xff] %vm151, %v188
    // Predicated region
    $region34: #{bacteria_net_forward.1} parent=1 // pred_check
      _
    $region35: #{bacteria_net_forward.1} parent=1 // pred_check_branch
      %191 = sbr.rel (0) target = $region37
    $region36: #{bacteria_net_forward.1} parent=1 // pred_region
      _
    $region37: #{bacteria_net_forward.1} parent=1 // pred_fallthru
      _
    // Predicated region
    $region38: #{bacteria_net_forward.1} parent=1 // pred_check
      _
    $region39: #{bacteria_net_forward.1} parent=1 // pred_check_branch
      %193 = sbr.rel (0) target = $region41
    $region40: #{bacteria_net_forward.1} parent=1 // pred_region
      _
    $region41: #{bacteria_net_forward.1} parent=1 // pred_fallthru
      _
    %194 = vsyncpa [#allocation3], 1

</llo_original>
